<compile_context>
chip_gen: v5e
topology: v5e:2x2
jax: 0.10.0
libtpu: 0.0.40
codegen_flags: <defaults>
</compile_context>

<pallas_src>
import functools

import jax
import jax.numpy as jnp
from jax.experimental import pallas as pl
from jax.experimental.pallas import tpu as pltpu

_MIB = 1024 * 1024


def _round_up(x, m):
    return ((x + m - 1) // m) * m


def _round_down(x, m):
    return (x // m) * m


def _cdiv(a, b):
    return -(-a // b)


def _sublane_pad(c, itemsize):
    # VMEM tiles pad the second-to-last dim to the sublane pack:
    # 8 for 4-byte, 16 for 2-byte, 32 for 1-byte dtypes.
    pack = max(8, 32 // max(1, itemsize))
    return _round_up(c, pack)


def _tpu_config():
    """Returns (vmem_capacity_bytes, tensorcores_per_chip, pipeline_vmem_budget)."""
    vmem_cap = 64 * _MIB  # conservative default (v7x-sized) if the query fails
    try:
        info = pltpu.get_tpu_info()
        vmem_cap = int(getattr(info, "vmem_capacity_bytes", vmem_cap))
    except Exception:
        pass
    if vmem_cap < 16 * _MIB:
        vmem_cap = 64 * _MIB
    # Only the 64 MiB-VMEM generation (v7x) has 2 TensorCores per chip.
    num_cores = 2 if vmem_cap <= 80 * _MIB else 1
    # Pipeline scratch budget: ~9/16 of physical VMEM (72 MiB on 128 MiB parts,
    # 36 MiB on v7x), leaving headroom for Mosaic-internal scratch.
    budget = min(96 * _MIB, max(24 * _MIB, (vmem_cap * 9) // 16))
    return vmem_cap, num_cores, budget


def _pick_tile_n(C, N, in_bytes, out_bytes, B, *, budget, num_cores,
                 step_bytes_hi=16 * _MIB):
    """Lane tile (multiple of 128): as large as the VMEM budget and a ~16 MiB
    per-step HBM-traffic target allow, then shrunk (if needed) so a 2-core chip
    gets at least 2 grid steps per TensorCore."""
    n128 = _round_up(N, 128)

    c_in = _sublane_pad(C, in_bytes)
    c_out = _sublane_pad(C, out_bytes)
    c_f32 = _sublane_pad(C, 4)

    # VMEM bytes per lane of tile_n for one pipelined step:
    #   double-buffered input block + double-buffered output block
    #   + ~2 full-size f32 temporaries + small per-lane row stats.
    per_lane_vmem = (2 * c_in * in_bytes + 2 * c_out * out_bytes
                     + 2 * c_f32 * 4 + 64)
    by_budget = max(128, _round_down(budget // per_lane_vmem, 128))

    # HBM bytes moved per lane of tile_n per step (read + write, raw C).
    per_lane_hbm = max(1, C * (in_bytes + out_bytes))
    by_step_bytes = max(128, _round_down(step_bytes_hi // per_lane_hbm, 128))

    tile = max(128, min(n128, by_budget, by_step_bytes))

    # Megacore (v7x): guarantee >= 2 steps per TensorCore so the double-buffered
    # pipeline actually overlaps DMA with compute on both cores.
    if num_cores >= 2 and N > 128:
        min_total_steps = 2 * num_cores
        if B * _cdiv(N, tile) < min_total_steps:
            per_batch = _cdiv(min_total_steps, B)
            tile = max(128, min(tile, _round_up(_cdiv(N, per_batch), 128)))
    return tile


def _chan_ln_kernel(x_ref, g_ref, o_ref, *, eps):
    # x_ref: (1, C, TN)   g_ref: (1, C, 1)   o_ref: (1, C, TN)
    x = x_ref[...].astype(jnp.float32)
    mean = jnp.mean(x, axis=1, keepdims=True)                 # (1, 1, TN)
    d = x - mean
    var = jnp.mean(d * d, axis=1, keepdims=True)              # unbiased=False
    inv = jax.lax.rsqrt(jnp.maximum(var, eps))                # clamp(min=eps).rsqrt()
    g = g_ref[...].astype(jnp.float32)                        # (1, C, 1)
    # Recompute (x - mean) at the store (left-to-right so no extra full-size
    # (1, C, TN) intermediate from inv*g is materialized).
    o_ref[...] = (((x - mean) * inv) * g).astype(o_ref.dtype)


def layer_norm(x, g):
    """Channel LayerNorm: x (B, C, *spatial), g of C elements (channel gain)."""
    orig_shape = x.shape
    B, C = orig_shape[0], orig_shape[1]
    N = 1
    for s in orig_shape[2:]:
        N *= s
    N = max(N, 1)

    g_arr = jnp.asarray(g)
    out_dtype = jnp.result_type(x.dtype, g_arr.dtype)         # matches torch promotion
    eps = 1e-05 if x.dtype == jnp.float32 else 1e-03

    x3 = x.reshape(B, C, N)
    g3 = g_arr.reshape(1, C, 1)

    in_b = jnp.dtype(x.dtype).itemsize
    out_b = jnp.dtype(out_dtype).itemsize

    vmem_cap, num_cores, budget = _tpu_config()
    tile_n = _pick_tile_n(C, N, in_b, out_b, B, budget=budget, num_cores=num_cores)

    # Ragged last lane block is safe: the reduction runs over C only, so padded
    # lanes never contaminate valid lanes, and OOB lane writes are clipped.
    grid = (B, _cdiv(N, tile_n))

    c_in = _sublane_pad(C, in_b)
    c_out = _sublane_pad(C, out_b)
    c_f32 = _sublane_pad(C, 4)
    est = tile_n * (2 * c_in * in_b + 2 * c_out * out_b + 2 * c_f32 * 4) + _MIB
    vmem_limit = int(min(max(32 * _MIB, budget + 8 * _MIB, est + est // 4),
                         (vmem_cap * 3) // 4))

    out = pl.pallas_call(
        functools.partial(_chan_ln_kernel, eps=eps),
        out_shape=jax.ShapeDtypeStruct((B, C, N), out_dtype),
        grid_spec=pltpu.PrefetchScalarGridSpec(
            num_scalar_prefetch=0,
            grid=grid,
            in_specs=[
                pl.BlockSpec((1, C, tile_n), lambda b, n: (b, 0, n)),
                # Constant block index: Pallas fetches the gain once and keeps
                # it resident across all grid steps.
                pl.BlockSpec((1, C, 1), lambda b, n: (0, 0, 0)),
            ],
            out_specs=pl.BlockSpec((1, C, tile_n), lambda b, n: (b, 0, n)),
        ),
        compiler_params=pltpu.CompilerParams(
            dimension_semantics=("parallel", "parallel"),
            vmem_limit_bytes=vmem_limit,
        ),
    )(x3, g3)

    return out.reshape(orig_shape)


def _reference(x, g):
    eps = 1e-05 if x.dtype == jnp.float32 else 1e-03
    xf = x.astype(jnp.float32)
    mean = jnp.mean(xf, axis=1, keepdims=True)
    var = jnp.mean((xf - mean) ** 2, axis=1, keepdims=True)
    y = (xf - mean) * jax.lax.rsqrt(jnp.maximum(var, eps))
    gb = jnp.asarray(g).reshape((1, -1) + (1,) * (x.ndim - 2)).astype(jnp.float32)
    return (y * gb).astype(jnp.result_type(x.dtype, jnp.asarray(g).dtype))


if __name__ == "__main__":
    key = jax.random.PRNGKey(0)
    B, C, F, H, W = 2, 4, 3, 8, 16
    x = jax.random.normal(key, (B, C, F, H, W), dtype=jnp.float32)
    # Deterministic parameter init matching nn.Parameter(torch.ones(dim)).
    g = jnp.ones((C,), dtype=jnp.float32)

    out = jax.block_until_ready(layer_norm(x, g))

    ref = _reference(x, g)
    assert out.shape == (B, C, F, H, W)
    assert out.dtype == ref.dtype
    assert jnp.allclose(out, ref, atol=1e-5, rtol=1e-5)
    print("KERNEL_OK")
</pallas_src>

<mosaic_0001>
module attributes {stable_mosaic.version = 11 : i64} {
  func.func @_chan_ln_kernel(%arg0: i32, %arg1: i32, %arg2: memref<1x4x256xf32, #tpu.memory_space<vmem>>, %arg3: memref<1x4x1xf32, #tpu.memory_space<vmem>>, %arg4: memref<1x4x256xf32, #tpu.memory_space<vmem>>) attributes {dimension_semantics = [#tpu.dimension_semantics<parallel>, #tpu.dimension_semantics<parallel>], iteration_bounds = array<i64: 2, 2>, scalar_prefetch = 0 : i64, scratch_operands = 0 : i64, tpu.core_type = #tpu.core_type<tc>, window_params = [{transform_indices = @transform_0, window_bounds = array<i64: 1, 4, 256>}, {pipeline_mode = #tpu.pipeline_mode<synchronous>, transform_indices = @transform_1, window_bounds = array<i64: 1, 4, 1>}, {transform_indices = @transform_2, window_bounds = array<i64: 1, 4, 256>}]} {
    %c0 = arith.constant 0 : index
    %c0_0 = arith.constant 0 : index
    %c0_1 = arith.constant 0 : index
    %0 = vector.load %arg2[%c0, %c0_0, %c0_1] : memref<1x4x256xf32, #tpu.memory_space<vmem>>, vector<1x4x256xf32>
    %cst = arith.constant dense<0.000000e+00> : vector<1x256xf32>
    %1 = vector.multi_reduction <add>, %0, %cst [1] : vector<1x4x256xf32> to vector<1x256xf32>
    %2 = vector.shape_cast %1 : vector<1x256xf32> to vector<1x1x256xf32>
    %cst_2 = arith.constant 4.000000e+00 : f32
    %3 = vector.broadcast %cst_2 : f32 to vector<1x1x256xf32>
    %4 = arith.divf %2, %3 : vector<1x1x256xf32>
    %5 = vector.broadcast %4 : vector<1x1x256xf32> to vector<1x4x256xf32>
    %6 = arith.subf %0, %5 : vector<1x4x256xf32>
    %7 = arith.mulf %6, %6 : vector<1x4x256xf32>
    %cst_3 = arith.constant dense<0.000000e+00> : vector<1x256xf32>
    %8 = vector.multi_reduction <add>, %7, %cst_3 [1] : vector<1x4x256xf32> to vector<1x256xf32>
    %9 = vector.shape_cast %8 : vector<1x256xf32> to vector<1x1x256xf32>
    %cst_4 = arith.constant 4.000000e+00 : f32
    %10 = vector.broadcast %cst_4 : f32 to vector<1x1x256xf32>
    %11 = arith.divf %9, %10 : vector<1x1x256xf32>
    %cst_5 = arith.constant 9.99999974E-6 : f32
    %12 = vector.broadcast %cst_5 : f32 to vector<1x1x256xf32>
    %13 = arith.maximumf %11, %12 : vector<1x1x256xf32>
    %14 = math.rsqrt %13 : vector<1x1x256xf32>
    %c0_6 = arith.constant 0 : index
    %c0_7 = arith.constant 0 : index
    %c0_8 = arith.constant 0 : index
    %15 = vector.load %arg3[%c0_6, %c0_7, %c0_8] : memref<1x4x1xf32, #tpu.memory_space<vmem>>, vector<1x4x1xf32>
    %16 = vector.broadcast %4 : vector<1x1x256xf32> to vector<1x4x256xf32>
    %17 = arith.subf %0, %16 : vector<1x4x256xf32>
    %18 = vector.broadcast %14 : vector<1x1x256xf32> to vector<1x4x256xf32>
    %19 = arith.mulf %17, %18 : vector<1x4x256xf32>
    %20 = vector.broadcast %15 : vector<1x4x1xf32> to vector<1x4x256xf32>
    %21 = arith.mulf %19, %20 : vector<1x4x256xf32>
    %c0_9 = arith.constant 0 : index
    %c0_10 = arith.constant 0 : index
    %c0_11 = arith.constant 0 : index
    %22 = vector.load %arg4[%c0_9, %c0_10, %c0_11] : memref<1x4x256xf32, #tpu.memory_space<vmem>>, vector<1x4x256xf32>
    tpu.vector_store %arg4[%c0_9, %c0_10, %c0_11], %21 {strides = array<i32>} : memref<1x4x256xf32, #tpu.memory_space<vmem>>, vector<1x4x256xf32>,
    return
  }
  func.func @transform_0(%arg0: i32, %arg1: i32) -> (i32, i32, i32) {
    %c0_i32 = arith.constant 0 : i32
    %c0_i32_0 = arith.constant 0 : i32
    return %arg0, %c0_i32, %arg1 : i32, i32, i32
  }
  func.func @transform_1(%arg0: i32, %arg1: i32) -> (i32, i32, i32) {
    %c0_i32 = arith.constant 0 : i32
    %c0_i32_0 = arith.constant 0 : i32
    %c0_i32_1 = arith.constant 0 : i32
    %c0_i32_2 = arith.constant 0 : i32
    return %c0_i32, %c0_i32_0, %c0_i32_1 : i32, i32, i32
  }
  func.func @transform_2(%arg0: i32, %arg1: i32) -> (i32, i32, i32) {
    %c0_i32 = arith.constant 0 : i32
    %c0_i32_0 = arith.constant 0 : i32
    return %arg0, %c0_i32, %arg1 : i32, i32, i32
  }
}

</mosaic_0001>

<llo_original>
// kernel: tpu_custom_call.1
$region0: #{tpu_custom_call.1}
  #allocation0 [shape = 'u32[]', space=smem, size = 0x4, offset = 0x4, fixed_abs, tag = 'smem constant byte address 0x4 - core index']
  #allocation1 [shape = 'u32[72,128]{1,0:T(1,128)}', space=vmem, size = 0x9000, scoped, tag = 'internal scratch']
  %s0 = inlined_call_operand.hbm [shape: f32[2,4,384], index: 0, kind: input, shape index: {}]
  %s1 = inlined_call_operand.vmem [shape: f32[1,4,1], index: 1, kind: input, shape index: {}]
  %s2 = inlined_call_operand.hbm [shape: f32[2,4,384], index: 2, kind: output, shape index: {}]
  %s3 = sld [smem:[#allocation0]]
  $region45: #{tpu_custom_call.1} parent=0
    _
  %s5 = ssub.s32 1, %s3
  %s6 = scalar_select 0, %s5, %s3
  $region1: #{tpu_custom_call.1} parent=0
    #allocation2 [shape = 'u8[8192]{0}', space=vmem, size = 0x2000, scoped, tag = 'input window, operand 0']
    #allocation3 [shape = 's32[2]{0}', space=sflag, size = 0x8, scoped, tag = 'scoped memory for tpu_custom_call.1']
    #allocation4 [shape = 's32[2]{0}', space=sflag, size = 0x8, scoped, tag = 'scoped memory for tpu_custom_call.1']
    #allocation5 [shape = 'u8[8192]{0}', space=vmem, size = 0x2000, scoped, tag = 'output window, operand 0']
    %7 = vsyncpa [#allocation3], 0
    %s8 = scalar_lea.sflag [#allocation3], 1
    %9 = vsyncpa %s8, 0
    %10 = vsyncpa [#allocation4], 0
    %s11 = scalar_lea.sflag [#allocation4], 1
    %12 = vsyncpa %s11, 0
    loop: start=0, step=1, limit=6
    $region2: #{tpu_custom_call.1} parent=1 // loop_pre_header
      _
    $region3: #{tpu_custom_call.1} parent=1 // loop_header
      %s14 = sphi 0, %s18
      %p15 = scmp.ge.s32.totalorder %s14, 6
      %s21 = sphi 0, %s33
      %s22 = sphi 0, %s29
      %s23 = sphi 0, %s21
      %s24 = sphi 0, %s22
      %s25 = sphi 0, %s23
      %s26 = sphi 0, %s24
      %s38 = sphi 0, %s40
      %s41 = sphi 0, %s38
      %s42 = sphi 0, %s41
      %s58 = sphi 0, %s42
      %s62 = sphi 0, %s62
      %s64 = sphi 0, %s62
      %s65 = sphi 0, %s64
      %s79 = sphi 0, %s65
      %s87 = sphi 0, %s89
      %s90 = sphi 0, %s87
      %s91 = sphi 0, %s90
      %s107 = sphi 0, %s91
    $region4: #{tpu_custom_call.1} parent=1 // loop_header_branch
      %17 = sbr.rel (%p15) target = $region8
    $region5: #{tpu_custom_call.1} parent=1 // loop_body
      %s19 = ssub.s32 %s14, 1
      %s20 = ssub.s32 %s14, 2
      %s27 = sadd.s32 1, %s22
      %p28 = scmp.ge.s32.totalorder %s27, 2
      %s29 = scalar_select %p28, 0, %s27
      %s30 = sadd.s32 1, %s21
      %s31 = scalar_select %p28, %s30, %s21
      %p32 = scmp.ge.s32.totalorder %s31, 2
      %s33 = scalar_select %p32, 0, %s31
      %s34 = ssub.s32 %s21, %s33
      %s35 = ssub.s32 %s22, %s29
      %s36 = sor.u32 %s34, %s35
      %p37 = scmp.eq.s32.totalorder %s36, 0
      %s39 = sadd.s32 %s38, 1
      %s40 = scalar_select %p37, %s38, %s39
      %p43 = pneg %p37
      %p44 = scmp.eq.s32.totalorder %s14, 3
      %p45 = por %p43, %p44
      %p46 = scmp.ne.s32.totalorder %s38, %s41
      %p47 = scmp.eq.s32.totalorder %s14, 0
      %p48 = por %p46, %p47
      %p49 = scmp.ne.s32.totalorder %s38, %s41
      %p50 = scmp.eq.s32.totalorder %s19, 3
      %p51 = por %p49, %p50
      %p52 = scmp.ne.s32.totalorder %s41, %s42
      %p53 = scmp.eq.s32.totalorder %s19, 0
      %p54 = por %p52, %p53
      %p55 = scmp.ne.s32.totalorder %s41, %s42
      %p56 = scmp.eq.s32.totalorder %s20, 3
      %p57 = por %p55, %p56
      %p59 = scmp.ne.s32.totalorder %s42, %s58
      %p60 = scmp.eq.s32.totalorder %s20, 0
      %p61 = por %p59, %p60
      %s63 = sadd.s32 %s62, 1
      %p66 = scmp.eq.s32.totalorder %s14, 3
      %p67 = scmp.ne.s32.totalorder %s62, %s64
      %p68 = scmp.eq.s32.totalorder %s14, 0
      %p69 = por %p67, %p68
      %p70 = scmp.ne.s32.totalorder %s62, %s64
      %p71 = scmp.eq.s32.totalorder %s19, 3
      %p72 = por %p70, %p71
      %p73 = scmp.ne.s32.totalorder %s64, %s65
      %p74 = scmp.eq.s32.totalorder %s19, 0
      %p75 = por %p73, %p74
      %p76 = scmp.ne.s32.totalorder %s64, %s65
      %p77 = scmp.eq.s32.totalorder %s20, 3
      %p78 = por %p76, %p77
      %p80 = scmp.ne.s32.totalorder %s65, %s79
      %p81 = scmp.eq.s32.totalorder %s20, 0
      %p82 = por %p80, %p81
      %s83 = ssub.s32 %s21, %s33
      %s84 = ssub.s32 %s22, %s29
      %s85 = sor.u32 %s83, %s84
      %p86 = scmp.eq.s32.totalorder %s85, 0
      %s88 = sadd.s32 %s87, 1
      %s89 = scalar_select %p86, %s87, %s88
      %p92 = pneg %p86
      %p93 = scmp.eq.s32.totalorder %s14, 3
      %p94 = por %p92, %p93
      %p95 = scmp.ne.s32.totalorder %s87, %s90
      %p96 = scmp.eq.s32.totalorder %s14, 0
      %p97 = por %p95, %p96
      %p98 = scmp.ne.s32.totalorder %s87, %s90
      %p99 = scmp.eq.s32.totalorder %s19, 3
      %p100 = por %p98, %p99
      %p101 = scmp.ne.s32.totalorder %s90, %s91
      %p102 = scmp.eq.s32.totalorder %s19, 0
      %p103 = por %p101, %p102
      %p104 = scmp.ne.s32.totalorder %s90, %s91
      %p105 = scmp.eq.s32.totalorder %s20, 3
      %p106 = por %p104, %p105
      %p108 = scmp.ne.s32.totalorder %s91, %s107
      %p109 = scmp.eq.s32.totalorder %s20, 0
      %p110 = por %p108, %p109
      %p111 = scmp.le.s32.totalorder 1, %s14
      %p112 = scmp.lt.s32.totalorder %s14, 5
      %p113 = pnand %p111, %p112
      %p114 = pneg %p113
      // Predicated region
      $region9: #{tpu_custom_call.1} parent=5 // pred_check
        _
      $region10: #{tpu_custom_call.1} parent=5 // pred_check_branch
        %116 = sbr.rel (%p113) target = $region12
      $region11: #{tpu_custom_call.1} parent=5 // pred_region
        %s117 = ssub.s32 %s14, 1
        // Predicated region
        $region13: #{tpu_custom_call.1} parent=11 // pred_check
          %p118 = pneg %p75
        $region14: #{tpu_custom_call.1} parent=11 // pred_check_branch
          %120 = sbr.rel (%p118) target = $region16
        $region15: #{tpu_custom_call.1} parent=11 // pred_region
          _
        $region16: #{tpu_custom_call.1} parent=11 // pred_fallthru
          _
      $region12: #{tpu_custom_call.1} parent=5 // pred_fallthru
        _
      %p121 = scmp.lt.s32.totalorder %s14, 4
      // Predicated region
      $region17: #{tpu_custom_call.1} parent=5 // pred_check
        %p122 = pneg %p121
      $region18: #{tpu_custom_call.1} parent=5 // pred_check_branch
        %124 = sbr.rel (%p122) target = $region20
      $region19: #{tpu_custom_call.1} parent=5 // pred_region
        // Predicated region
        $region21: #{tpu_custom_call.1} parent=19 // pred_check
          %p125 = pneg %p48
        $region22: #{tpu_custom_call.1} parent=19 // pred_check_branch
          %127 = sbr.rel (%p125) target = $region24
        $region23: #{tpu_custom_call.1} parent=19 // pred_region
          %s128 = sand.u32 %s38, 1
          %s129 = scalar_lea.sflag [#allocation3], %s128
          %s130 = sand.u32 %s38, 1
          %s131 = smul.addr %s130, 8
          %s132 = scalar_lea.vmem [#allocation2], %s131
          %s133 = smul.u32 2, %s22
          %s134 = ssub.s32 3, %s133
          %p135 = scmp.lt.s32.totalorder %s134, 2
          %s136 = scalar_select %p135, %s134, 2
          %s137 = smul.u32 4, %s136
          %s138 = ssub.s32 8, %s137
          %s139 = sshll.u32 %s138, 4
          %140 = vsyncadd %s129, %s139
          %p141 = scmp.ne.s32.totalorder 0, %s137
          %s142 = smul.addr %s21, 3
          %s143 = sadd.s32 %s133, %s142
          %s144 = smul.addr %s143, 4
          %s145 = scalar_lea.hbm %s0, %s144
          %s146 = smul.u32 %s136, 4
          %s147 = sshll.u32 %s146, 4
          %s148 = sshll.u32 %s145, 4
          %s149 = int_to_ptr.hbm [resolvable:$true] %s148
          %s150 = sshll.u32 %s132, 4
          %s151 = int_to_ptr.vmem [resolvable:$true] %s150
          %153 = dma.hbm_to_vmem [thread:$0]  (%p141), %s149, %s147, %s151, %s129
        $region24: #{tpu_custom_call.1} parent=19 // pred_fallthru
          _
      $region20: #{tpu_custom_call.1} parent=5 // pred_fallthru
        _
      %p154 = scmp.le.s32.totalorder 1, %s14
      %p155 = scmp.lt.s32.totalorder %s14, 5
      %p156 = pnand %p154, %p155
      %p157 = pneg %p156
      // Predicated region
      $region25: #{tpu_custom_call.1} parent=5 // pred_check
        _
      $region26: #{tpu_custom_call.1} parent=5 // pred_check_branch
        %159 = sbr.rel (%p156) target = $region28
      $region27: #{tpu_custom_call.1} parent=5 // pred_region
        %s160 = ssub.s32 %s14, 1
        %s161 = sand.u32 %s41, 1
        %s162 = scalar_lea.sflag [#allocation3], %s161
        %s163 = sand.u32 %s41, 1
        %s164 = smul.addr %s163, 8
        %s165 = scalar_lea.vmem [#allocation2], %s164
        // Predicated region
        $region29: #{tpu_custom_call.1} parent=27 // pred_check
          %p166 = pneg %p54
        $region30: #{tpu_custom_call.1} parent=27 // pred_check_branch
          %168 = sbr.rel (%p166) target = $region32
        $region31: #{tpu_custom_call.1} parent=27 // pred_region
          %170 = dma.done %s162, 128
        $region32: #{tpu_custom_call.1} parent=27 // pred_fallthru
          _
        %s171 = sand.u32 %s41, 1
        %s172 = scalar_lea.sflag [#allocation3], %s171
        %s173 = sand.u32 %s41, 1
        %s174 = smul.addr %s173, 8
        %s175 = scalar_lea.vmem [#allocation2], %s174
        %p176 = pneg %p54
        %p177 = pneg %p51
        %p178 = pneg %p75
        %p179 = pneg %p72
        %p180 = pneg %p103
        %p181 = pneg %p100
        %s182 = sand.u32 %s90, 1
        %s183 = scalar_lea.sflag [#allocation4], %s182
        %s184 = sand.u32 %s90, 1
        %s185 = smul.addr %s184, 8
        %s186 = scalar_lea.vmem [#allocation5], %s185
        %s187 = smul.u32 2, %s24
        %s188 = ssub.s32 3, %s187
        %p189 = scmp.lt.s32.totalorder %s188, 2
        %s190 = scalar_select %p189, %s188, 2
        %s191 = smul.u32 4, %s190
        %s192 = smul.u32 2, %s24
        %s193 = ssub.s32 3, %s192
        %p194 = scmp.lt.s32.totalorder %s193, 2
        %s195 = scalar_select %p194, %s193, 2
        %s196 = smul.u32 4, %s195
        %v197 = vld [vmem:[%s165] sm:$0xff]
        %199 = vst [vmem:[#allocation1] ss:$2 sm:$0xff] %v197
        %v200 = vld.sshfl [vmem:[#allocation1] sm:$0xff pattern:$0x75316420]
        %v201 = vld.sshfl [vmem:[#allocation1 + $0x8] sm:$0xff pattern:$0x75316420]
        %vm204 = vcmask 1043456
        %v205 = vsel %vm204, %v200, 0.0
        %v206 = vrot.slane %v205, 4
        %v207 = vadd.f32 %v205, %v206
        %v208 = vrot.slane %v207, 2
        %v209 = vadd.f32 %v207, %v208
        %v210 = vrot.slane %v209, 1
        %v211 = vadd.f32 %v209, %v210
        %v212 = vsel %vm204, %v201, 0.0
        %v213 = vrot.slane %v212, 4
        %v214 = vadd.f32 %v212, %v213
        %v215 = vrot.slane %v214, 2
        %v216 = vadd.f32 %v214, %v215
        %v217 = vrot.slane %v216, 1
        %v218 = vadd.f32 %v216, %v217
        %v219 = vrcp.pop 4.0
        %v220 = vmul.f32 4.0, %v219
        %v221 = vsub.f32 1.0, %v220
        %v222 = vmul.f32 %v219, %v221
        %v223 = vadd.f32 %v219, %v222
        %vm224 = vweird.f32 %v219
        %v225 = vsel %vm224, %v219, %v223
        %v226 = vmul.f32 %v211, %v225
        %v227 = vmul.f32 %v218, %v225
        %v230 = vrot.slane %v227, 4
        %v231 = vsel %vm204, %v226, %v230
        %v233 = vsub.f32 %v197, %v231
        %v234 = vmul.f32 %v233, %v233
        %236 = vst [vmem:[#allocation1] ss:$2 sm:$0xff] %v234
        %v237 = vld.sshfl [vmem:[#allocation1] sm:$0xff pattern:$0x75316420]
        %v238 = vld.sshfl [vmem:[#allocation1 + $0x8] sm:$0xff pattern:$0x75316420]
        %v241 = vsel %vm204, %v237, 0.0
        %v242 = vrot.slane %v241, 4
        %v243 = vadd.f32 %v241, %v242
        %v244 = vrot.slane %v243, 2
        %v245 = vadd.f32 %v243, %v244
        %v246 = vrot.slane %v245, 1
        %v247 = vadd.f32 %v245, %v246
        %v248 = vsel %vm204, %v238, 0.0
        %v249 = vrot.slane %v248, 4
        %v250 = vadd.f32 %v248, %v249
        %v251 = vrot.slane %v250, 2
        %v252 = vadd.f32 %v250, %v251
        %v253 = vrot.slane %v252, 1
        %v254 = vadd.f32 %v252, %v253
        %v255 = vmul.f32 %v247, %v225
        %v256 = vmul.f32 %v254, %v225
        %v257 = vmax.f32 %v255, 1e-05
        %v258 = vmax.f32 %v256, 1e-05
        %v259 = vrsqrt.pop %v257
        %v260 = vmul.f32 %v259, %v257
        %v261 = vmul.f32 %v260, %v259
        %v262 = vmul.f32 0.5, %v261
        %v263 = vsub.f32 1.5, %v262
        %v264 = vmul.f32 %v259, %v263
        %vm265 = vweird.f32 %v257
        %vm266 = vweird.f32 %v259
        %vm267 = vmor %vm265, %vm266
        %v268 = vsel %vm267, %v259, %v264
        %v269 = vrsqrt.pop %v258
        %v270 = vmul.f32 %v269, %v258
        %v271 = vmul.f32 %v270, %v269
        %v272 = vmul.f32 0.5, %v271
        %v273 = vsub.f32 1.5, %v272
        %v274 = vmul.f32 %v269, %v273
        %vm275 = vweird.f32 %v258
        %vm276 = vweird.f32 %v269
        %vm277 = vmor %vm275, %vm276
        %v278 = vsel %vm277, %v269, %v274
        %v279 = vld [vmem:[%s1] sm:$0xf]
        %v282 = vrot.slane %v278, 4
        %v283 = vsel %vm204, %v268, %v282
        %v285 = vmul.f32 %v233, %v283
        %287 = vset.pattern.permute.xlu0 0
        %288 = vperm.xlu0 %287, %v279
        %v289 = vpop.permute.xlu0 %288
        %v291 = vunpack.c.l.s4 839922192
        %v292 = vunpack.c.0.s8 %v291
        %v293 = vperm.slane %v289, %v292
        %v295 = vmul.f32 %v285, %v293
        %296 = vst [vmem:[%s186] sm:$0xff] %v295
        %s297 = sand.u32 %s90, 1
        %s298 = scalar_lea.sflag [#allocation4], %s297
        %s299 = sand.u32 %s90, 1
        %s300 = smul.addr %s299, 8
        %s301 = scalar_lea.vmem [#allocation5], %s300
        // Predicated region
        $region33: #{tpu_custom_call.1} parent=27 // pred_check
          %p302 = pneg %p100
        $region34: #{tpu_custom_call.1} parent=27 // pred_check_branch
          %304 = sbr.rel (%p302) target = $region36
        $region35: #{tpu_custom_call.1} parent=27 // pred_region
          %s305 = smul.u32 2, %s24
          %s306 = ssub.s32 3, %s305
          %p307 = scmp.lt.s32.totalorder %s306, 2
          %s308 = scalar_select %p307, %s306, 2
          %s309 = smul.u32 4, %s308
          %s310 = ssub.s32 8, %s309
          %s311 = sshll.u32 %s310, 4
          %312 = vsyncadd %s298, %s311
          %p313 = scmp.ne.s32.totalorder 0, %s309
          %s314 = smul.addr %s23, 3
          %s315 = sadd.s32 %s305, %s314
          %s316 = smul.addr %s315, 4
          %s317 = scalar_lea.hbm %s2, %s316
          %s318 = smul.u32 %s308, 4
          %s319 = sshll.u32 %s318, 4
          %s320 = sshll.u32 %s301, 4
          %s321 = int_to_ptr.vmem [resolvable:$true] %s320
          %s322 = sshll.u32 %s317, 4
          %s323 = int_to_ptr.hbm [resolvable:$true] %s322
          %325 = dma.vmem_to_hbm [thread:$0]  (%p313), %s321, %s319, %s323, %s298
        $region36: #{tpu_custom_call.1} parent=27 // pred_fallthru
          _
      $region28: #{tpu_custom_call.1} parent=5 // pred_fallthru
        _
      %p326 = scmp.le.s32.totalorder 2, %s14
      // Predicated region
      $region37: #{tpu_custom_call.1} parent=5 // pred_check
        %p327 = pneg %p326
      $region38: #{tpu_custom_call.1} parent=5 // pred_check_branch
        %329 = sbr.rel (%p327) target = $region40
      $region39: #{tpu_custom_call.1} parent=5 // pred_region
        %s330 = ssub.s32 %s14, 2
        // Predicated region
        $region41: #{tpu_custom_call.1} parent=39 // pred_check
          %p331 = pneg %p106
        $region42: #{tpu_custom_call.1} parent=39 // pred_check_branch
          %333 = sbr.rel (%p331) target = $region44
        $region43: #{tpu_custom_call.1} parent=39 // pred_region
          %s334 = sand.u32 %s91, 1
          %s335 = scalar_lea.sflag [#allocation4], %s334
          %s336 = sand.u32 %s91, 1
          %s337 = smul.addr %s336, 8
          %s338 = scalar_lea.vmem [#allocation5], %s337
          %340 = dma.done %s335, 128
        $region44: #{tpu_custom_call.1} parent=39 // pred_fallthru
          _
      $region40: #{tpu_custom_call.1} parent=5 // pred_fallthru
        _
    $region6: #{tpu_custom_call.1} parent=1 // loop_footer
      %s18 = sadd.s32 1, %s14
    $region7: #{tpu_custom_call.1} parent=1 // loop_footer_branch
      %13 = sbr.rel target = $region3
    $region8: #{tpu_custom_call.1} parent=1 // loop_exit
      _
    %341 = vsyncpa [#allocation3], 1
    %s342 = scalar_lea.sflag [#allocation3], 1
    %343 = vsyncpa %s342, 1
    %344 = vsyncpa [#allocation4], 1
    %s345 = scalar_lea.sflag [#allocation4], 1
    %346 = vsyncpa %s345, 1

</llo_original>
